<compile_context>
chip_gen: v5e
topology: v5e:2x2
jax: 0.10.0
libtpu: 0.0.40
codegen_flags: <defaults>
</compile_context>

<pallas_src>
import functools

import jax
import jax.numpy as jnp
from jax.experimental import pallas as pl
from jax.experimental.pallas import tpu as pltpu

_LANE = 128
_SUBLANE = {2: 16, 4: 8}            # compute-dtype itemsize -> sublane packing
_FUSE_TAPS_MAX_CIN = 128            # below this, fold K taps into one contraction


def _vmem_capacity_bytes():
    """Physical VMEM of the local TPU (conservative 64 MiB fallback)."""
    try:
        return int(pltpu.get_tpu_info().vmem_capacity_bytes)
    except Exception:
        return 64 * 1024 * 1024     # v7x-sized conservative default


def _pick_t_tile(t_out_full, vmem_cap):
    """Lane-dense time tile: big (amortize grid-step overhead), prefer exact."""
    t_lane = pl.cdiv(t_out_full, _LANE) * _LANE
    max_tile = 1024 if vmem_cap >= 96 * 1024 * 1024 else 512
    max_tile = min(max_tile, t_lane)
    # Prefer a tile in (max_tile/2, max_tile] that divides the lane-rounded
    # output exactly, so the wrapper's final slice becomes a no-op.
    for cand in (1024, 768, 512, 384, 256, 128):
        if cand <= max_tile and cand * 2 > max_tile and t_lane % cand == 0:
            return cand
    return max_tile


def _block_spec(block_shape, index_map, *, single_buffer=False):
    """BlockSpec helper: single-buffer grid-invariant operands when possible."""
    if single_buffer:
        try:
            return pl.BlockSpec(block_shape, index_map,
                                pipeline_mode=pl.Buffered(1))
        except (TypeError, AttributeError):
            pass
    return pl.BlockSpec(block_shape, index_map)


def _conv1d_kernel(x_ref, w_ref, b_ref, o_ref, *, k_size, dilation, t_tile,
                   halo_pad, c_in, fuse_taps):
    """One (batch, time-tile) block of a dilated 1-D convolution (stride 1).

    x_ref: (1, c_in, T_in_pad)   padded input slab (resident across time tiles)
    w_ref: (C_out, K*c_in)       weight with taps folded into the contraction dim
    b_ref: (C_out, 1)            bias (f32)
    o_ref: (1, C_out, t_tile)    lane-dense output tile (f32)
    """
    t0 = pl.multiple_of(pl.program_id(1) * t_tile, _LANE)

    # One aligned window load per tile: output tile + 128-rounded halo.
    win = x_ref[0, :, pl.ds(t0, t_tile + halo_pad)]      # (c_in, t_tile+halo)

    if k_size == 1:
        acc = jnp.dot(w_ref[...], win[:, :t_tile],
                      preferred_element_type=jnp.float32)
    elif fuse_taps:
        # Small C_in: im2col once, one K*c_in-deep MXU contraction.
        rhs = jnp.concatenate(
            [win[:, k * dilation:k * dilation + t_tile] for k in range(k_size)],
            axis=0)                                       # (K*c_in, t_tile)
        acc = jnp.dot(w_ref[...], rhs, preferred_element_type=jnp.float32)
    else:
        # Large C_in: K accumulating dots, no K*c_in x t_tile VMEM temp.
        acc = jnp.dot(w_ref[:, :c_in], win[:, :t_tile],
                      preferred_element_type=jnp.float32)
        for k in range(1, k_size):
            acc += jnp.dot(w_ref[:, k * c_in:(k + 1) * c_in],
                           win[:, k * dilation:k * dilation + t_tile],
                           preferred_element_type=jnp.float32)

    o_ref[0] = (acc + b_ref[...]).astype(o_ref.dtype)


@functools.partial(
    jax.jit, static_argnames=("stride", "padding", "dilation", "compute_dtype"))
def conv_norm_forward(x, weight, bias, *, stride=1, padding=None, dilation=1,
                      compute_dtype=jnp.bfloat16):
    """ConvNorm.forward: Conv1d(x) with the module's padding/stride/dilation.

    x:      (B, C_in, T)      float32
    weight: (C_out, C_in, K)  float32
    bias:   (C_out,)          float32
    compute_dtype: MXU input dtype (bf16 default; accumulation stays f32).
    returns (B, C_out, T_out) float32
    """
    B, C_in, T = x.shape
    C_out, _, K = weight.shape
    if padding is None:
        padding = dilation * (K - 1) // 2

    receptive = dilation * (K - 1)
    t_out_full = T + 2 * padding - receptive             # stride-1 output length

    cdt = jnp.dtype(compute_dtype)
    sub = _SUBLANE.get(cdt.itemsize, 8)
    c_in_pad = pl.cdiv(C_in, sub) * sub                  # sublane-aligned channels

    vmem_cap = _vmem_capacity_bytes()
    t_tile = _pick_t_tile(t_out_full, vmem_cap)
    n_t = pl.cdiv(t_out_full, t_tile)
    t_out_pad = n_t * t_tile
    halo_pad = 0 if K == 1 else pl.cdiv(receptive, _LANE) * _LANE
    t_in_pad = t_out_pad + halo_pad

    # Single wrapper pad: conv 'same' zeros + lane alignment + halo + channel
    # padding, already in the MXU compute dtype.
    x_pad = jnp.pad(x.astype(cdt),
                    ((0, 0), (0, c_in_pad - C_in),
                     (padding, t_in_pad - T - padding)))

    # Weight re-layout: (C_out, C_in, K) -> (C_out, K*c_in_pad), C_in on lanes;
    # padded channels carry zero weights so results are exact.
    w_kc = jnp.pad(jnp.transpose(weight, (0, 2, 1)),
                   ((0, 0), (0, 0), (0, c_in_pad - C_in)))
    w_mat = w_kc.reshape(C_out, K * c_in_pad).astype(cdt)
    bias2d = bias.reshape(C_out, 1).astype(jnp.float32)

    fuse_taps = K > 1 and c_in_pad < _FUSE_TAPS_MAX_CIN

    kernel = functools.partial(
        _conv1d_kernel, k_size=K, dilation=dilation, t_tile=t_tile,
        halo_pad=halo_pad, c_in=c_in_pad, fuse_taps=fuse_taps)

    # --- VMEM budget / cost model -------------------------------------------
    vmem_need = (c_in_pad * t_in_pad * cdt.itemsize            # slab (Buffered(1))
                 + C_out * K * c_in_pad * cdt.itemsize         # weights (Buffered(1))
                 + C_out * 4                                    # bias
                 + 2 * C_out * t_tile * 4                       # double-buffered out
                 + c_in_pad * (t_tile + halo_pad) * cdt.itemsize       # window
                 + (K * c_in_pad * t_tile * cdt.itemsize if fuse_taps else 0)
                 + C_out * t_tile * 4)                          # f32 acc
    vmem_ceiling = int(0.8 * vmem_cap)      # ~51 MiB on v7x, ~102 MiB on v5e/v6e
    vmem_limit = int(min(vmem_ceiling,
                         max(16 * 1024 * 1024, int(1.5 * vmem_need))))

    flops = 2 * B * C_out * t_out_full * C_in * K
    bytes_accessed = (x_pad.size * cdt.itemsize + w_mat.size * cdt.itemsize
                      + bias2d.size * 4 + B * C_out * t_out_pad * 4)

    out_full = pl.pallas_call(
        kernel,
        out_shape=jax.ShapeDtypeStruct((B, C_out, t_out_pad), jnp.float32),
        grid_spec=pltpu.PrefetchScalarGridSpec(
            num_scalar_prefetch=0,
            grid=(B, n_t),
            in_specs=[
                # Full padded slab per batch; block index constant over the
                # time axis => DMA'd once per batch element, reused across
                # tiles. Single-buffered: no pointless second slab in VMEM.
                _block_spec((1, c_in_pad, t_in_pad), lambda b, t: (b, 0, 0),
                            single_buffer=True),
                # Weights / bias: constant over the whole grid.
                _block_spec((C_out, K * c_in_pad), lambda b, t: (0, 0),
                            single_buffer=True),
                _block_spec((C_out, 1), lambda b, t: (0, 0),
                            single_buffer=True),
            ],
            out_specs=pl.BlockSpec((1, C_out, t_tile), lambda b, t: (b, 0, t)),
        ),
        compiler_params=pltpu.CompilerParams(
            # Split the v7x core pair on batch (keeps the slab-per-core design);
            # with B == 1 fall back to splitting on time.
            dimension_semantics=(("parallel", "arbitrary") if B > 1
                                 else ("parallel", "parallel")),
            vmem_limit_bytes=vmem_limit),
        cost_estimate=pl.CostEstimate(flops=flops, transcendentals=0,
                                      bytes_accessed=bytes_accessed),
    )(x_pad, w_mat, bias2d)

    out = out_full[:, :, :t_out_full]
    if stride > 1:
        # TODO(synk): native strided RHS gather instead of subsampling.
        out = out[:, :, ::stride]
    return out


def init_conv_norm_params(key, in_channels, out_channels, kernel_size,
                          w_init_gain="linear"):
    """Deterministic parameter init matching ConvNorm.__init__ semantics."""
    k_w, k_b = jax.random.split(key)

    # torch.nn.init.xavier_uniform_ with gain = calculate_gain('linear') == 1.0
    gain = 1.0
    fan_in = in_channels * kernel_size
    fan_out = out_channels * kernel_size
    bound_w = gain * (6.0 / (fan_in + fan_out)) ** 0.5
    weight = jax.random.uniform(
        k_w, (out_channels, in_channels, kernel_size),
        minval=-bound_w, maxval=bound_w, dtype=jnp.float32)

    # Conv1d default bias init: U(-1/sqrt(fan_in), 1/sqrt(fan_in))
    bound_b = 1.0 / (fan_in ** 0.5)
    bias = jax.random.uniform(
        k_b, (out_channels,), minval=-bound_b, maxval=bound_b,
        dtype=jnp.float32)
    return weight, bias


def _ref_conv(x, weight, bias, *, stride=1, padding=0, dilation=1, dtype=None):
    """lax reference; optionally with bf16 inputs + f32 accumulation."""
    xr, wr = (x, weight) if dtype is None else (x.astype(dtype), weight.astype(dtype))
    out = jax.lax.conv_general_dilated(
        xr, wr, window_strides=(stride,), padding=[(padding, padding)],
        rhs_dilation=(dilation,), dimension_numbers=("NCH", "OIH", "NCH"),
        preferred_element_type=jnp.float32)
    return out + bias.reshape(1, -1, 1)


if __name__ == "__main__":
    key = jax.random.PRNGKey(0)
    k_x, k_p, k_x3, k_p3 = jax.random.split(key, 4)

    # Small shapes consistent with Conv1d on (B, C_in, T).
    B, C_IN, C_OUT, T, K = 2, 4, 8, 16, 3
    x = jax.random.normal(k_x, (B, C_IN, T), dtype=jnp.float32)
    weight, bias = init_conv_norm_params(k_p, C_IN, C_OUT, K)

    # Case 1: ConvNorm defaults (stride=1, dilation=1, 'same' padding),
    # default bf16 MXU inputs + f32 accumulation.
    padding = (K - 1) // 2
    out = conv_norm_forward(x, weight, bias, stride=1, padding=padding,
                            dilation=1)
    jax.block_until_ready(out)
    assert out.shape == (B, C_OUT, T)
    ref_bf16 = _ref_conv(x, weight, bias, padding=padding, dtype=jnp.bfloat16)
    assert jnp.allclose(out, ref_bf16, atol=1e-3, rtol=1e-3)
    ref_f32 = _ref_conv(x, weight, bias, padding=padding)
    assert jnp.allclose(out, ref_f32, atol=1e-1, rtol=1e-1)   # bf16 rounding only

    # Case 2: non-default stride/dilation (halo + subsampling path), exact f32.
    dil2, str2 = 2, 2
    pad2 = dil2 * (K - 1) // 2
    out2 = conv_norm_forward(x, weight, bias, stride=str2, padding=pad2,
                             dilation=dil2, compute_dtype=jnp.float32)
    jax.block_until_ready(out2)
    ref2 = _ref_conv(x, weight, bias, stride=str2, padding=pad2, dilation=dil2)
    assert out2.shape == ref2.shape
    assert jnp.allclose(out2, ref2, atol=1e-5, rtol=1e-5)

    # Case 3: wide-channel config exercising the per-tap accumulating-dot path.
    C_IN3, C_OUT3, T3 = 128, 16, 32
    x3 = jax.random.normal(k_x3, (B, C_IN3, T3), dtype=jnp.float32)
    weight3, bias3 = init_conv_norm_params(k_p3, C_IN3, C_OUT3, K)
    out3 = conv_norm_forward(x3, weight3, bias3, stride=1, padding=(K - 1) // 2,
                             dilation=1)
    jax.block_until_ready(out3)
    ref3 = _ref_conv(x3, weight3, bias3, padding=(K - 1) // 2, dtype=jnp.bfloat16)
    assert out3.shape == (B, C_OUT3, T3)
    assert jnp.allclose(out3, ref3, atol=2e-3, rtol=2e-3)

    print("KERNEL_OK")
</pallas_src>

<mosaic_0001>
module attributes {stable_mosaic.version = 11 : i64} {
  func.func @_conv1d_kernel(%arg0: i32, %arg1: i32, %arg2: memref<1x16x256xbf16, #tpu.memory_space<vmem>>, %arg3: memref<8x48xbf16, #tpu.memory_space<vmem>>, %arg4: memref<8x1xf32, #tpu.memory_space<vmem>>, %arg5: memref<1x8x128xf32, #tpu.memory_space<vmem>>) attributes {dimension_semantics = [#tpu.dimension_semantics<parallel>, #tpu.dimension_semantics<arbitrary>], iteration_bounds = array<i64: 2, 1>, scalar_prefetch = 0 : i64, scratch_operands = 0 : i64, tpu.core_type = #tpu.core_type<tc>, window_params = [{pipeline_mode = #tpu.pipeline_mode<synchronous>, transform_indices = @transform_0, window_bounds = array<i64: 1, 16, 256>}, {pipeline_mode = #tpu.pipeline_mode<synchronous>, transform_indices = @transform_1, window_bounds = array<i64: 8, 48>}, {pipeline_mode = #tpu.pipeline_mode<synchronous>, transform_indices = @transform_2, window_bounds = array<i64: 8, 1>}, {transform_indices = @transform_3, window_bounds = array<i64: 1, 8, 128>}]} {
    %c128_i32 = arith.constant 128 : i32
    %0 = arith.muli %arg1, %c128_i32 : i32
    %1 = tpu.assume_multiple %0, 128 : i32
    %c0 = arith.constant 0 : index
    %c0_0 = arith.constant 0 : index
    %2 = arith.index_cast %1 : i32 to index
    %3 = vector.load %arg2[%c0, %c0_0, %2] : memref<1x16x256xbf16, #tpu.memory_space<vmem>>, vector<1x16x256xbf16>
    %4 = vector.shape_cast %3 : vector<1x16x256xbf16> to vector<16x256xbf16>
    %5 = vector.extract_strided_slice %4 {offsets = [0, 0], sizes = [16, 128], strides = [1, 1]} : vector<16x256xbf16> to vector<16x128xbf16>
    %6 = vector.extract_strided_slice %4 {offsets = [0, 1], sizes = [16, 128], strides = [1, 1]} : vector<16x256xbf16> to vector<16x128xbf16>
    %7 = vector.extract_strided_slice %4 {offsets = [0, 2], sizes = [16, 128], strides = [1, 1]} : vector<16x256xbf16> to vector<16x128xbf16>
    %8 = tpu.concatenate %5, %6, %7 in 0 : vector<16x128xbf16>, vector<16x128xbf16>, vector<16x128xbf16> -> vector<48x128xbf16>
    %c0_1 = arith.constant 0 : index
    %c0_2 = arith.constant 0 : index
    %9 = vector.load %arg3[%c0_1, %c0_2] : memref<8x48xbf16, #tpu.memory_space<vmem>>, vector<8x48xbf16>
    %cst = arith.constant dense<0.000000e+00> : vector<8x128xf32>
    %10 = tpu.matmul %9, %8, %cst {dimension_numbers = #tpu.dot_dimension_numbers<[1], [0], [0], [1], [0, 0, 1, 1], [], []>} : vector<8x48xbf16>, vector<48x128xbf16>, vector<8x128xf32> -> vector<8x128xf32>
    %c0_3 = arith.constant 0 : index
    %c0_4 = arith.constant 0 : index
    %11 = vector.load %arg4[%c0_3, %c0_4] : memref<8x1xf32, #tpu.memory_space<vmem>>, vector<8x1xf32>
    %12 = vector.broadcast %11 : vector<8x1xf32> to vector<8x128xf32>
    %13 = arith.addf %10, %12 : vector<8x128xf32>
    %c0_5 = arith.constant 0 : index
    %c0_6 = arith.constant 0 : index
    %c0_7 = arith.constant 0 : index
    %14 = vector.load %arg5[%c0_5, %c0_6, %c0_7] : memref<1x8x128xf32, #tpu.memory_space<vmem>>, vector<1x8x128xf32>
    %15 = vector.shape_cast %14 : vector<1x8x128xf32> to vector<8x128xf32>
    %16 = vector.shape_cast %13 : vector<8x128xf32> to vector<1x8x128xf32>
    tpu.vector_store %arg5[%c0_5, %c0_6, %c0_7], %16 {strides = array<i32>} : memref<1x8x128xf32, #tpu.memory_space<vmem>>, vector<1x8x128xf32>,
    return
  }
  func.func @transform_0(%arg0: i32, %arg1: i32) -> (i32, i32, i32) {
    %c0_i32 = arith.constant 0 : i32
    %c0_i32_0 = arith.constant 0 : i32
    %c0_i32_1 = arith.constant 0 : i32
    return %arg0, %c0_i32, %c0_i32_0 : i32, i32, i32
  }
  func.func @transform_1(%arg0: i32, %arg1: i32) -> (i32, i32) {
    %c0_i32 = arith.constant 0 : i32
    %c0_i32_0 = arith.constant 0 : i32
    %c0_i32_1 = arith.constant 0 : i32
    return %c0_i32, %c0_i32_0 : i32, i32
  }
  func.func @transform_2(%arg0: i32, %arg1: i32) -> (i32, i32) {
    %c0_i32 = arith.constant 0 : i32
    %c0_i32_0 = arith.constant 0 : i32
    %c0_i32_1 = arith.constant 0 : i32
    return %c0_i32, %c0_i32_0 : i32, i32
  }
  func.func @transform_3(%arg0: i32, %arg1: i32) -> (i32, i32, i32) {
    %c0_i32 = arith.constant 0 : i32
    %c0_i32_0 = arith.constant 0 : i32
    return %arg0, %c0_i32, %arg1 : i32, i32, i32
  }
}

</mosaic_0001>

<llo_original>
// kernel: conv_norm_forward.1
$region0: #{conv_norm_forward.1}
  #allocation0 [shape = 'u32[]', space=smem, size = 0x4, offset = 0x4, fixed_abs, tag = 'smem constant byte address 0x4 - core index']
  #allocation1 [shape = 'u32[72,128]{1,0:T(1,128)}', space=vmem, size = 0x9000, scoped, tag = 'internal scratch']
  %s0 = inlined_call_operand.vmem [shape: bf16[2,16,256], index: 0, kind: input, shape index: {}]
  %s1 = inlined_call_operand.vmem [shape: bf16[8,48], index: 1, kind: input, shape index: {}]
  %s2 = inlined_call_operand.vmem [shape: f32[8,1], index: 2, kind: input, shape index: {}]
  %s3 = inlined_call_operand.hbm [shape: f32[2,8,128], index: 3, kind: output, shape index: {}]
  %s4 = sld [smem:[#allocation0]]
  $region45: #{conv_norm_forward.1} parent=0
    _
  %s6 = ssub.s32 1, %s4
  %s7 = scalar_select 0, %s6, %s4
  $region1: #{conv_norm_forward.1} parent=0
    #allocation2 [shape = 'u8[8192]{0}', space=vmem, size = 0x2000, scoped, tag = 'output window, operand 0']
    #allocation3 [shape = 's32[2]{0}', space=sflag, size = 0x8, scoped, tag = 'scoped memory for conv_norm_forward.1']
    %8 = vsyncpa [#allocation3], 0
    %s9 = scalar_lea.sflag [#allocation3], 1
    %10 = vsyncpa %s9, 0
    loop: start=0, step=1, limit=4
    $region2: #{conv_norm_forward.1} parent=1 // loop_pre_header
      _
    $region3: #{conv_norm_forward.1} parent=1 // loop_header
      %s12 = sphi 0, %s16
      %p13 = scmp.ge.s32.totalorder %s12, 4
      %s19 = sphi 0, %s31
      %s20 = sphi 0, %s27
      %s21 = sphi 0, %s19
      %s22 = sphi 0, %s20
      %s23 = sphi 0, %s21
      %s24 = sphi 0, %s22
      %s34 = sphi 0, %s36
      %s37 = sphi 0, %s34
      %s38 = sphi 0, %s37
      %s54 = sphi 0, %s38
      %s58 = sphi 0, %s58
      %s60 = sphi 0, %s58
      %s61 = sphi 0, %s60
      %s75 = sphi 0, %s61
      %s79 = sphi 0, %s79
      %s81 = sphi 0, %s79
      %s82 = sphi 0, %s81
      %s96 = sphi 0, %s82
      %s104 = sphi 0, %s106
      %s107 = sphi 0, %s104
      %s108 = sphi 0, %s107
      %s124 = sphi 0, %s108
    $region4: #{conv_norm_forward.1} parent=1 // loop_header_branch
      %15 = sbr.rel (%p13) target = $region8
    $region5: #{conv_norm_forward.1} parent=1 // loop_body
      %s17 = ssub.s32 %s12, 1
      %s18 = ssub.s32 %s12, 2
      %s25 = sadd.s32 1, %s20
      %p26 = scmp.ge.s32.totalorder %s25, 1
      %s27 = scalar_select %p26, 0, %s25
      %s28 = sadd.s32 1, %s19
      %s29 = scalar_select %p26, %s28, %s19
      %p30 = scmp.ge.s32.totalorder %s29, 2
      %s31 = scalar_select %p30, 0, %s29
      %s32 = ssub.s32 %s19, %s31
      %p33 = scmp.eq.s32.totalorder %s32, 0
      %s35 = sadd.s32 %s34, 1
      %s36 = scalar_select %p33, %s34, %s35
      %p39 = pneg %p33
      %p40 = scmp.eq.s32.totalorder %s12, 1
      %p41 = por %p39, %p40
      %p42 = scmp.ne.s32.totalorder %s34, %s37
      %p43 = scmp.eq.s32.totalorder %s12, 0
      %p44 = por %p42, %p43
      %p45 = scmp.ne.s32.totalorder %s34, %s37
      %p46 = scmp.eq.s32.totalorder %s17, 1
      %p47 = por %p45, %p46
      %p48 = scmp.ne.s32.totalorder %s37, %s38
      %p49 = scmp.eq.s32.totalorder %s17, 0
      %p50 = por %p48, %p49
      %p51 = scmp.ne.s32.totalorder %s37, %s38
      %p52 = scmp.eq.s32.totalorder %s18, 1
      %p53 = por %p51, %p52
      %p55 = scmp.ne.s32.totalorder %s38, %s54
      %p56 = scmp.eq.s32.totalorder %s18, 0
      %p57 = por %p55, %p56
      %s59 = sadd.s32 %s58, 1
      %p62 = scmp.eq.s32.totalorder %s12, 1
      %p63 = scmp.ne.s32.totalorder %s58, %s60
      %p64 = scmp.eq.s32.totalorder %s12, 0
      %p65 = por %p63, %p64
      %p66 = scmp.ne.s32.totalorder %s58, %s60
      %p67 = scmp.eq.s32.totalorder %s17, 1
      %p68 = por %p66, %p67
      %p69 = scmp.ne.s32.totalorder %s60, %s61
      %p70 = scmp.eq.s32.totalorder %s17, 0
      %p71 = por %p69, %p70
      %p72 = scmp.ne.s32.totalorder %s60, %s61
      %p73 = scmp.eq.s32.totalorder %s18, 1
      %p74 = por %p72, %p73
      %p76 = scmp.ne.s32.totalorder %s61, %s75
      %p77 = scmp.eq.s32.totalorder %s18, 0
      %p78 = por %p76, %p77
      %s80 = sadd.s32 %s79, 1
      %p83 = scmp.eq.s32.totalorder %s12, 1
      %p84 = scmp.ne.s32.totalorder %s79, %s81
      %p85 = scmp.eq.s32.totalorder %s12, 0
      %p86 = por %p84, %p85
      %p87 = scmp.ne.s32.totalorder %s79, %s81
      %p88 = scmp.eq.s32.totalorder %s17, 1
      %p89 = por %p87, %p88
      %p90 = scmp.ne.s32.totalorder %s81, %s82
      %p91 = scmp.eq.s32.totalorder %s17, 0
      %p92 = por %p90, %p91
      %p93 = scmp.ne.s32.totalorder %s81, %s82
      %p94 = scmp.eq.s32.totalorder %s18, 1
      %p95 = por %p93, %p94
      %p97 = scmp.ne.s32.totalorder %s82, %s96
      %p98 = scmp.eq.s32.totalorder %s18, 0
      %p99 = por %p97, %p98
      %s100 = ssub.s32 %s19, %s31
      %s101 = ssub.s32 %s20, %s27
      %s102 = sor.u32 %s100, %s101
      %p103 = scmp.eq.s32.totalorder %s102, 0
      %s105 = sadd.s32 %s104, 1
      %s106 = scalar_select %p103, %s104, %s105
      %p109 = pneg %p103
      %p110 = scmp.eq.s32.totalorder %s12, 1
      %p111 = por %p109, %p110
      %p112 = scmp.ne.s32.totalorder %s104, %s107
      %p113 = scmp.eq.s32.totalorder %s12, 0
      %p114 = por %p112, %p113
      %p115 = scmp.ne.s32.totalorder %s104, %s107
      %p116 = scmp.eq.s32.totalorder %s17, 1
      %p117 = por %p115, %p116
      %p118 = scmp.ne.s32.totalorder %s107, %s108
      %p119 = scmp.eq.s32.totalorder %s17, 0
      %p120 = por %p118, %p119
      %p121 = scmp.ne.s32.totalorder %s107, %s108
      %p122 = scmp.eq.s32.totalorder %s18, 1
      %p123 = por %p121, %p122
      %p125 = scmp.ne.s32.totalorder %s108, %s124
      %p126 = scmp.eq.s32.totalorder %s18, 0
      %p127 = por %p125, %p126
      %p128 = scmp.le.s32.totalorder 1, %s12
      %p129 = scmp.lt.s32.totalorder %s12, 3
      %p130 = pnand %p128, %p129
      %p131 = pneg %p130
      // Predicated region
      $region9: #{conv_norm_forward.1} parent=5 // pred_check
        _
      $region10: #{conv_norm_forward.1} parent=5 // pred_check_branch
        %133 = sbr.rel (%p130) target = $region12
      $region11: #{conv_norm_forward.1} parent=5 // pred_region
        %s134 = ssub.s32 %s12, 1
        // Predicated region
        $region13: #{conv_norm_forward.1} parent=11 // pred_check
          %p135 = pneg %p50
        $region14: #{conv_norm_forward.1} parent=11 // pred_check_branch
          %137 = sbr.rel (%p135) target = $region16
        $region15: #{conv_norm_forward.1} parent=11 // pred_region
          %p138 = scmp.lt.s32.totalorder %s21, 1
          %s139 = scalar_select %p138, %s21, 1
          %s140 = smul.addr %s139, 4
          %s141 = smul.addr %s140, 4
          %s142 = scalar_lea.vmem %s0, %s141
        $region16: #{conv_norm_forward.1} parent=11 // pred_fallthru
          _
        // Predicated region
        $region17: #{conv_norm_forward.1} parent=11 // pred_check
          %p143 = pneg %p71
        $region18: #{conv_norm_forward.1} parent=11 // pred_check_branch
          %145 = sbr.rel (%p143) target = $region20
        $region19: #{conv_norm_forward.1} parent=11 // pred_region
          _
        $region20: #{conv_norm_forward.1} parent=11 // pred_fallthru
          _
        // Predicated region
        $region21: #{conv_norm_forward.1} parent=11 // pred_check
          %p146 = pneg %p92
        $region22: #{conv_norm_forward.1} parent=11 // pred_check_branch
          %148 = sbr.rel (%p146) target = $region24
        $region23: #{conv_norm_forward.1} parent=11 // pred_region
          _
        $region24: #{conv_norm_forward.1} parent=11 // pred_fallthru
          _
      $region12: #{conv_norm_forward.1} parent=5 // pred_fallthru
        _
      %p149 = scmp.lt.s32.totalorder %s12, 2
      // Predicated region
      $region25: #{conv_norm_forward.1} parent=5 // pred_check
        %p150 = pneg %p149
      $region26: #{conv_norm_forward.1} parent=5 // pred_check_branch
        %152 = sbr.rel (%p150) target = $region28
      $region27: #{conv_norm_forward.1} parent=5 // pred_region
        _
      $region28: #{conv_norm_forward.1} parent=5 // pred_fallthru
        _
      %p153 = scmp.le.s32.totalorder 1, %s12
      %p154 = scmp.lt.s32.totalorder %s12, 3
      %p155 = pnand %p153, %p154
      %p156 = pneg %p155
      // Predicated region
      $region29: #{conv_norm_forward.1} parent=5 // pred_check
        _
      $region30: #{conv_norm_forward.1} parent=5 // pred_check_branch
        %158 = sbr.rel (%p155) target = $region32
      $region31: #{conv_norm_forward.1} parent=5 // pred_region
        %s159 = ssub.s32 %s12, 1
        %p160 = scmp.lt.s32.totalorder %s21, 1
        %s161 = scalar_select %p160, %s21, 1
        %s162 = smul.addr %s161, 4
        %s163 = smul.addr %s162, 4
        %s164 = scalar_lea.vmem %s0, %s163
        %p165 = pneg %p50
        %p166 = pneg %p47
        %p167 = pneg %p71
        %p168 = pneg %p68
        %p169 = pneg %p92
        %p170 = pneg %p89
        %p171 = pneg %p120
        %p172 = pneg %p117
        %s173 = sand.u32 %s107, 1
        %s174 = scalar_lea.sflag [#allocation3], %s173
        %s175 = sand.u32 %s107, 1
        %s176 = smul.addr %s175, 8
        %s177 = scalar_lea.vmem [#allocation2], %s176
        %p178 = scmp.lt.s32.totalorder %s21, 1
        %s179 = scalar_select %p178, %s21, 1
        %s180 = smul.addr %s179, 4
        %s181 = smul.addr %s180, 4
        %s182 = scalar_lea.vmem %s0, %s181
        %s184 = smul.u32 %s22, 128
        %s185 = sshra.s32 %s184, 7
        %s186 = sand.u32 %s184, 127
        %s187 = smul.addr %s185, 4
        %s188 = scalar_lea.vmem %s182, %s187
        %v189 = vld [vmem:[%s188] sm:$0xff]
        %v190 = vld [vmem:[%s188 + $0x8] sm:$0xff]
        %v193 = vunpack.c.l.b16 %v189
        %v194 = vunpack.c.l.b16 %v190
        %v195 = vpack.c.b16 %v194, %v193
        %v197 = vunpack.c.h.b16 %v189
        %v198 = vunpack.c.h.b16 %v190
        %v199 = vpack.c.b16 %v198, %v197
        %200 = vrot.lane.b32.xlu0 %v195, 127
        %v201 = vpop.permute.xlu0 %200
        %202 = vrot.lane.b32.xlu0 %v199, 127
        %v203 = vpop.permute.xlu0 %202
        %vm204 = vcmask 1039360
        %v205 = vsel %vm204, %v201, %v203
        %207 = vrot.lane.b32.xlu0 %v195, 126
        %v208 = vpop.permute.xlu0 %207
        %209 = vrot.lane.b32.xlu0 %v199, 126
        %v210 = vpop.permute.xlu0 %209
        %vm211 = vcmask 1031168
        %v212 = vsel %vm211, %v208, %v210
        %v214 = vld [vmem:[%s1] sm:$0xf]
        %v215 = vld [vmem:[%s2] sm:$0xff]
        %217 = vset.pattern.permute.xlu0 0
        %218 = vperm.xlu0 %217, %v215
        %v219 = vpop.permute.xlu0 %218
        %vm221 = vcmask 392192
        %v223 = vsel %vm221, %v214, 0
        %225 = vmatpush.bf16.msra.mxu0 0
        %226 = vmatpush.bf16.msra.mxu0 0
        %227 = vmatpush.bf16.msra.mxu0 0
        %228 = vmatpush.bf16.msra.mxu0 0
        %229 = vmatpush.bf16.msra.mxu0 0
        %230 = vmatpush.bf16.msra.mxu0 %v212
        %231 = vmatpush.bf16.msra.mxu0 %v205
        %232 = vmatpush.bf16.msra.mxu0 %v195
        %233 = vmatmul.bf16.gmra.mxu0 %v223
        %v234 = vpop.f32.mrf.mxu0
        %v235 = vadd.f32 %v219, %v234
        %v236 = vpop.f32.mrf.mxu0
        %237 = vdwg.mxu0
        %238 = vst [vmem:[%s177] sm:$0xff] %v235
        %s239 = sand.u32 %s107, 1
        %s240 = scalar_lea.sflag [#allocation3], %s239
        %s241 = sand.u32 %s107, 1
        %s242 = smul.addr %s241, 8
        %s243 = scalar_lea.vmem [#allocation2], %s242
        // Predicated region
        $region33: #{conv_norm_forward.1} parent=31 // pred_check
          %p244 = pneg %p117
        $region34: #{conv_norm_forward.1} parent=31 // pred_check_branch
          %246 = sbr.rel (%p244) target = $region36
        $region35: #{conv_norm_forward.1} parent=31 // pred_region
          %248 = vsyncadd %s240, 0
          %s249 = sadd.s32 %s22, %s21
          %s250 = smul.addr %s249, 8
          %s251 = scalar_lea.hbm %s3, %s250
          %s253 = sshll.u32 %s243, 4
          %s254 = int_to_ptr.vmem [resolvable:$true] %s253
          %s255 = sshll.u32 %s251, 4
          %s256 = int_to_ptr.hbm [resolvable:$true] %s255
          %258 = dma.vmem_to_hbm [thread:$0]  %s254, 128, %s256, %s240
        $region36: #{conv_norm_forward.1} parent=31 // pred_fallthru
          _
      $region32: #{conv_norm_forward.1} parent=5 // pred_fallthru
        _
      %p259 = scmp.le.s32.totalorder 2, %s12
      // Predicated region
      $region37: #{conv_norm_forward.1} parent=5 // pred_check
        %p260 = pneg %p259
      $region38: #{conv_norm_forward.1} parent=5 // pred_check_branch
        %262 = sbr.rel (%p260) target = $region40
      $region39: #{conv_norm_forward.1} parent=5 // pred_region
        %s263 = ssub.s32 %s12, 2
        // Predicated region
        $region41: #{conv_norm_forward.1} parent=39 // pred_check
          %p264 = pneg %p123
        $region42: #{conv_norm_forward.1} parent=39 // pred_check_branch
          %266 = sbr.rel (%p264) target = $region44
        $region43: #{conv_norm_forward.1} parent=39 // pred_region
          %s267 = sand.u32 %s108, 1
          %s268 = scalar_lea.sflag [#allocation3], %s267
          %s269 = sand.u32 %s108, 1
          %s270 = smul.addr %s269, 8
          %s271 = scalar_lea.vmem [#allocation2], %s270
          %273 = dma.done %s268, 128
        $region44: #{conv_norm_forward.1} parent=39 // pred_fallthru
          _
      $region40: #{conv_norm_forward.1} parent=5 // pred_fallthru
        _
    $region6: #{conv_norm_forward.1} parent=1 // loop_footer
      %s16 = sadd.s32 1, %s12
    $region7: #{conv_norm_forward.1} parent=1 // loop_footer_branch
      %11 = sbr.rel target = $region3
    $region8: #{conv_norm_forward.1} parent=1 // loop_exit
      _
    %274 = vsyncpa [#allocation3], 1
    %s275 = scalar_lea.sflag [#allocation3], 1
    %276 = vsyncpa %s275, 1

</llo_original>
